<compile_context>
chip_gen: v5e
topology: v5e:2x2
jax: 0.10.0
libtpu: 0.0.40
codegen_flags: <defaults>
</compile_context>

<pallas_src>
import functools

import jax
import jax.numpy as jnp
from jax.experimental import pallas as pl
from jax.experimental.pallas import tpu as pltpu


_VMEM_LIMIT = 32 * 1024 * 1024  # safe scoped-VMEM budget on v5e/v6e/v7x


# ----------------------------- Pallas kernels ------------------------------ #

def _linear_bias_kernel(x_ref, w_ref, b_ref, o_ref, acc_ref):
    """Tiled o = x @ w + b with f32 accumulation over the k grid axis."""
    @pl.when(pl.program_id(2) == 0)
    def _():
        acc_ref[...] = jnp.zeros_like(acc_ref)

    acc_ref[...] += jnp.dot(x_ref[...], w_ref[...],
                            preferred_element_type=jnp.float32)

    @pl.when(pl.program_id(2) == pl.num_programs(2) - 1)
    def _():
        o_ref[...] = (acc_ref[...] + b_ref[...].astype(jnp.float32)
                      ).astype(o_ref.dtype)


def _linear_nobias_kernel(x_ref, w_ref, o_ref, acc_ref):
    """Tiled o = x @ w (no bias DMA / add) with f32 accumulation."""
    @pl.when(pl.program_id(2) == 0)
    def _():
        acc_ref[...] = jnp.zeros_like(acc_ref)

    acc_ref[...] += jnp.dot(x_ref[...], w_ref[...],
                            preferred_element_type=jnp.float32)

    @pl.when(pl.program_id(2) == pl.num_programs(2) - 1)
    def _():
        o_ref[...] = acc_ref[...].astype(o_ref.dtype)


def _attn_kernel(qkv_ref, o_ref, *, num_heads, scale):
    """One batch element per grid step: all H heads, output written lane-dense.

    qkv_ref: (N, 3C) slab for this batch element, columns laid out as
             [q(C) | k(C) | v(C)], head h at column offset h*D inside each.
    o_ref  : (N, C) output block, already in (B, N, C) layout.
    """
    N, C3 = qkv_ref.shape
    C = C3 // 3
    D = C // num_heads

    qkv = qkv_ref[...]                                       # (N, 3C)

    # TODO(synk): for large N (>= ~1-2K) switch to online-softmax (flash)
    # tiling over a KV grid axis; the full (N, N) score block does not fit
    # VMEM there (esp. v7x's 64 MiB).
    head_outs = []
    for h in range(num_heads):   # static unroll: all heads in one grid step
        q = qkv[:, h * D:(h + 1) * D].astype(jnp.float32) * scale      # (N, D)
        k = qkv[:, C + h * D:C + (h + 1) * D].astype(jnp.float32)      # (N, D)
        v = qkv[:, 2 * C + h * D:2 * C + (h + 1) * D]                  # (N, D)

        s = jnp.dot(q, k.T, preferred_element_type=jnp.float32)        # (N, N)
        m = jnp.max(s, axis=-1, keepdims=True)
        p = jnp.exp(s - m)
        l = jnp.sum(p, axis=-1, keepdims=True)
        r = pl.reciprocal(l, approx=True)        # EUP vrcp (free slot)
        r = r * (2.0 - l * r)                    # one Newton step -> ~f32 exact
        p = p * r
        # NOTE: on v6e/v7x, casting q/k/v and p to bf16 here (keeping the f32
        # accumulation via preferred_element_type) roughly doubles MXU rate and
        # halves VMEM traffic; kept f32 to match the f32 reference tolerance.
        o = jnp.dot(p.astype(v.dtype), v,
                    preferred_element_type=jnp.float32)                # (N, D)
        head_outs.append(o)

    out = jnp.concatenate(head_outs, axis=-1)                          # (N, C)
    o_ref[...] = out.astype(o_ref.dtype)


# ------------------------------ Wrappers ----------------------------------- #

def _fit_tile(dim, target):
    """Largest legal tile: full dim if small, else `target` when it divides."""
    if dim <= target:
        return dim
    return target if dim % target == 0 else dim  # fallback: full dim


def linear_pallas(x2d, w_t, b=None, *, tm=256, tn=256, tk=512):
    """x2d: (M, K), w_t: (K, Nout), optional b: (Nout,) -> (M, Nout)."""
    M, K = x2d.shape
    K2, Nout = w_t.shape
    assert K == K2
    tm = _fit_tile(M, tm)
    tn = _fit_tile(Nout, tn)
    tk = _fit_tile(K, tk)

    grid = (M // tm, Nout // tn, K // tk)
    x_spec = pl.BlockSpec((tm, tk), lambda i, j, k: (i, k))
    w_spec = pl.BlockSpec((tk, tn), lambda i, j, k: (k, j))
    o_spec = pl.BlockSpec((tm, tn), lambda i, j, k: (i, j))
    scratch = [pltpu.VMEM((tm, tn), jnp.float32)]
    cparams = pltpu.CompilerParams(
        dimension_semantics=("parallel", "parallel", "arbitrary"),
        vmem_limit_bytes=_VMEM_LIMIT,
    )

    if b is None:
        return pl.pallas_call(
            _linear_nobias_kernel,
            out_shape=jax.ShapeDtypeStruct((M, Nout), x2d.dtype),
            grid=grid,
            in_specs=[x_spec, w_spec],
            out_specs=o_spec,
            scratch_shapes=scratch,
            compiler_params=cparams,
        )(x2d, w_t)

    b_spec = pl.BlockSpec((1, tn), lambda i, j, k: (0, j))
    return pl.pallas_call(
        _linear_bias_kernel,
        out_shape=jax.ShapeDtypeStruct((M, Nout), x2d.dtype),
        grid=grid,
        in_specs=[x_spec, w_spec, b_spec],
        out_specs=o_spec,
        scratch_shapes=scratch,
        compiler_params=cparams,
    )(x2d, w_t, b.reshape(1, Nout))


def sdpa_pallas(qkv, num_heads, scale):
    """qkv: (B, N, 3C) -> attention output (B, N, C) (already merged heads)."""
    B, N, C3 = qkv.shape
    C = C3 // 3
    kern = functools.partial(_attn_kernel, num_heads=num_heads, scale=scale)
    return pl.pallas_call(
        kern,
        out_shape=jax.ShapeDtypeStruct((B, N, C), qkv.dtype),
        grid=(B,),
        in_specs=[pl.BlockSpec((pl.Squeezed(), N, C3), lambda b: (b, 0, 0))],
        out_specs=pl.BlockSpec((pl.Squeezed(), N, C), lambda b: (b, 0, 0)),
        compiler_params=pltpu.CompilerParams(
            dimension_semantics=("parallel",),
            vmem_limit_bytes=_VMEM_LIMIT,
        ),
    )(qkv)


def attention_forward(x, params, num_heads):
    """Full Attention.forward. x: (B, N, C)."""
    B, N, C = x.shape
    head_dim = C // num_heads
    scale = head_dim ** -0.5

    # qkv projection (qkv_bias=False -> no bias operand at all)
    qkv = linear_pallas(x.reshape(B * N, C), params["w_qkv_t"])     # (B*N, 3C)
    qkv = qkv.reshape(B, N, 3 * C)                                  # free reshape

    # q_norm / k_norm are Identity (qk_norm=False); dropouts are no-ops (p=0).
    # Attention kernel slices q/k/v per head directly from the (N, 3C) slab and
    # writes the output straight in (B, N, C) layout -> no transposes in HBM.
    o = sdpa_pallas(qkv, num_heads, scale)                          # (B, N, C)

    # output projection (has bias)
    out = linear_pallas(o.reshape(B * N, C),
                        params["w_proj_t"], params["b_proj"])
    return out.reshape(B, N, C)


# ------------------------------ Reference ----------------------------------- #

def attention_reference(x, params, num_heads):
    B, N, C = x.shape
    head_dim = C // num_heads
    scale = head_dim ** -0.5
    qkv = x.reshape(B * N, C) @ params["w_qkv_t"]                    # no bias
    qkv = qkv.reshape(B, N, 3, num_heads, head_dim).transpose(2, 0, 3, 1, 4)
    q, k, v = qkv[0], qkv[1], qkv[2]
    s = jnp.einsum("bhnd,bhmd->bhnm", q * scale, k)
    p = jax.nn.softmax(s, axis=-1)
    o = jnp.einsum("bhnm,bhmd->bhnd", p, v)
    o = jnp.transpose(o, (0, 2, 1, 3)).reshape(B, N, C)
    return (o.reshape(B * N, C) @ params["w_proj_t"]
            + params["b_proj"]).reshape(B, N, C)


# -------------------------------- Main -------------------------------------- #

if __name__ == "__main__":
    # dim=128, num_heads=4 -> head_dim=32 (small but lane-aligned shapes)
    B, N, C, H = 2, 8, 128, 4

    key = jax.random.PRNGKey(0)
    kx, kw1, kw2, kb2 = jax.random.split(key, 4)

    x = jax.random.normal(kx, (B, N, C), dtype=jnp.float32)

    # Deterministic parameter init (nn.Linear-style shapes, scaled uniform).
    lim = 1.0 / (C ** 0.5)
    w_qkv = jax.random.uniform(kw1, (3 * C, C), jnp.float32, -lim, lim)
    w_proj = jax.random.uniform(kw2, (C, C), jnp.float32, -lim, lim)
    b_proj = jax.random.uniform(kb2, (C,), jnp.float32, -lim, lim)

    params = {
        "w_qkv_t": w_qkv.T,    # (C, 3C)
        "w_proj_t": w_proj.T,  # (C, C)
        "b_proj": b_proj,
    }

    out = attention_forward(x, params, num_heads=H)
    out = jax.block_until_ready(out)

    ref = attention_reference(x, params, num_heads=H)
    assert out.shape == (B, N, C)
    assert jnp.allclose(out, ref, atol=1e-4, rtol=1e-4), "mismatch vs reference"

    print("KERNEL_OK")
</pallas_src>

<mosaic_0001>
module attributes {stable_mosaic.version = 11 : i64} {
  func.func @_linear_nobias_kernel(%arg0: i32, %arg1: i32, %arg2: i32, %arg3: memref<16x128xf32, #tpu.memory_space<vmem>>, %arg4: memref<128x384xf32, #tpu.memory_space<vmem>>, %arg5: memref<16x384xf32, #tpu.memory_space<vmem>>, %arg6: memref<16x384xf32, #tpu.memory_space<vmem>>) attributes {dimension_semantics = [#tpu.dimension_semantics<parallel>, #tpu.dimension_semantics<parallel>, #tpu.dimension_semantics<arbitrary>], iteration_bounds = array<i64: 1, 1, 1>, scalar_prefetch = 0 : i64, scratch_operands = 1 : i64, tpu.core_type = #tpu.core_type<tc>, window_params = [{transform_indices = @transform_0, window_bounds = array<i64: 16, 128>}, {transform_indices = @transform_1, window_bounds = array<i64: 128, 384>}, {transform_indices = @transform_2, window_bounds = array<i64: 16, 384>}]} {
    %c0_i32 = arith.constant 0 : i32
    %0 = arith.cmpi eq, %arg2, %c0_i32 : i32
    %1 = arith.extui %0 : i1 to i32
    %c0_i32_0 = arith.constant 0 : i32
    %2 = arith.cmpi ne, %1, %c0_i32_0 : i32
    scf.if %2 {
      %cst_10 = arith.constant 0.000000e+00 : f32
      %12 = vector.broadcast %cst_10 : f32 to vector<16x384xf32>
      %c0_11 = arith.constant 0 : index
      %c0_12 = arith.constant 0 : index
      %13 = vector.load %arg6[%c0_11, %c0_12] : memref<16x384xf32, #tpu.memory_space<vmem>>, vector<16x384xf32>
      tpu.vector_store %arg6[%c0_11, %c0_12], %12 {strides = array<i32>} : memref<16x384xf32, #tpu.memory_space<vmem>>, vector<16x384xf32>,
    } else {
    }
    %c0 = arith.constant 0 : index
    %c0_1 = arith.constant 0 : index
    %3 = vector.load %arg6[%c0, %c0_1] : memref<16x384xf32, #tpu.memory_space<vmem>>, vector<16x384xf32>
    %c0_2 = arith.constant 0 : index
    %c0_3 = arith.constant 0 : index
    %4 = vector.load %arg3[%c0_2, %c0_3] : memref<16x128xf32, #tpu.memory_space<vmem>>, vector<16x128xf32>
    %c0_4 = arith.constant 0 : index
    %c0_5 = arith.constant 0 : index
    %5 = vector.load %arg4[%c0_4, %c0_5] : memref<128x384xf32, #tpu.memory_space<vmem>>, vector<128x384xf32>
    %cst = arith.constant dense<0.000000e+00> : vector<16x384xf32>
    %6 = tpu.matmul %4, %5, %cst {dimension_numbers = #tpu.dot_dimension_numbers<[1], [0], [0], [1], [0, 0, 1, 1], [], []>} : vector<16x128xf32>, vector<128x384xf32>, vector<16x384xf32> -> vector<16x384xf32>
    %7 = arith.addf %3, %6 : vector<16x384xf32>
    %c0_6 = arith.constant 0 : index
    %c0_7 = arith.constant 0 : index
    %8 = vector.load %arg6[%c0_6, %c0_7] : memref<16x384xf32, #tpu.memory_space<vmem>>, vector<16x384xf32>
    tpu.vector_store %arg6[%c0_6, %c0_7], %7 {strides = array<i32>} : memref<16x384xf32, #tpu.memory_space<vmem>>, vector<16x384xf32>,
    %c0_i32_8 = arith.constant 0 : i32
    %9 = arith.cmpi eq, %arg2, %c0_i32_8 : i32
    %10 = arith.extui %9 : i1 to i32
    %c0_i32_9 = arith.constant 0 : i32
    %11 = arith.cmpi ne, %10, %c0_i32_9 : i32
    scf.if %11 {
      %c0_10 = arith.constant 0 : index
      %c0_11 = arith.constant 0 : index
      %12 = vector.load %arg6[%c0_10, %c0_11] : memref<16x384xf32, #tpu.memory_space<vmem>>, vector<16x384xf32>
      %c0_12 = arith.constant 0 : index
      %c0_13 = arith.constant 0 : index
      %13 = vector.load %arg5[%c0_12, %c0_13] : memref<16x384xf32, #tpu.memory_space<vmem>>, vector<16x384xf32>
      tpu.vector_store %arg5[%c0_12, %c0_13], %12 {strides = array<i32>} : memref<16x384xf32, #tpu.memory_space<vmem>>, vector<16x384xf32>,
    } else {
    }
    return
  }
  func.func @transform_0(%arg0: i32, %arg1: i32, %arg2: i32) -> (i32, i32) {
    %c0_i32 = arith.constant 0 : i32
    return %arg0, %arg2 : i32, i32
  }
  func.func @transform_1(%arg0: i32, %arg1: i32, %arg2: i32) -> (i32, i32) {
    %c0_i32 = arith.constant 0 : i32
    return %arg2, %arg1 : i32, i32
  }
  func.func @transform_2(%arg0: i32, %arg1: i32, %arg2: i32) -> (i32, i32) {
    %c0_i32 = arith.constant 0 : i32
    return %arg0, %arg1 : i32, i32
  }
}

</mosaic_0001>

<llo_original>
// kernel: tpu_custom_call.1
$region0: #{tpu_custom_call.1}
  #allocation0 [shape = 'u32[]', space=smem, size = 0x4, offset = 0x4, fixed_abs, tag = 'smem constant byte address 0x4 - core index']
  #allocation1 [shape = 'u32[72,128]{1,0:T(1,128)}', space=vmem, size = 0x9000, scoped, tag = 'internal scratch']
  #allocation2 [shape = 'f32[16,384]{1,0:T(8,128)}', space=vmem, size = 0x6000, scoped, tag = 'scratch operand']
  %s0 = inlined_call_operand.hbm [shape: f32[16,128], index: 0, kind: input, shape index: {}]
  %s1 = inlined_call_operand.hbm [shape: f32[128,384], index: 1, kind: input, shape index: {}]
  %s2 = inlined_call_operand.hbm [shape: f32[16,384], index: 2, kind: output, shape index: {}]
  %s3 = sld [smem:[#allocation0]]
  $region34: #{tpu_custom_call.1} parent=0
    _
  %s5 = ssub.s32 1, %s3
  %s6 = scalar_select 0, %s5, %s3
  $region1: #{tpu_custom_call.1} parent=0
    #allocation3 [shape = 'u8[8192]{0}', space=vmem, size = 0x2000, scoped, tag = 'input window, operand 0, single buffered']
    #allocation4 [shape = 's32[1]{0}', space=sflag, size = 0x4, scoped, tag = 'scoped memory for tpu_custom_call.1']
    #allocation5 [shape = 's32[1]{0}', space=sflag, size = 0x4, scoped, tag = 'scoped memory for tpu_custom_call.1']
    #allocation6 [shape = 'u8[196608]{0}', space=vmem, size = 0x30000, scoped, tag = 'input window, operand 1, single buffered']
    #allocation7 [shape = 's32[1]{0}', space=sflag, size = 0x4, scoped, tag = 'scoped memory for tpu_custom_call.1']
    #allocation8 [shape = 'u8[24576]{0}', space=vmem, size = 0x6000, scoped, tag = 'output window, operand 0, single buffered']
    %7 = vsyncpa [#allocation4], 0
    %8 = vsyncpa [#allocation7], 0
    %9 = vsyncpa [#allocation5], 0
    // Predicated region
    $region2: #{tpu_custom_call.1} parent=1 // pred_check
      _
    $region3: #{tpu_custom_call.1} parent=1 // pred_check_branch
      %11 = sbr.rel (0) target = $region5
    $region4: #{tpu_custom_call.1} parent=1 // pred_region
      %13 = vsyncadd [#allocation4], 0
      %s14 = sshll.u32 %s0, 4
      %s15 = int_to_ptr.hbm [resolvable:$true] %s14
      %s16 = sshll.u32 [#allocation3], 4
      %s17 = int_to_ptr.vmem [resolvable:$true] %s16
      %22 = dma.hbm_to_vmem [thread:$0]  %s15, 256, %s17, [#allocation4], 128, 128, 8
    $region5: #{tpu_custom_call.1} parent=1 // pred_fallthru
      _
    // Predicated region
    $region6: #{tpu_custom_call.1} parent=1 // pred_check
      _
    $region7: #{tpu_custom_call.1} parent=1 // pred_check_branch
      %24 = sbr.rel (0) target = $region9
    $region8: #{tpu_custom_call.1} parent=1 // pred_region
      %26 = vsyncadd [#allocation7], 0
      %s27 = sshll.u32 %s1, 4
      %s28 = int_to_ptr.hbm [resolvable:$true] %s27
      %s29 = sshll.u32 [#allocation6], 4
      %s30 = int_to_ptr.vmem [resolvable:$true] %s29
      %35 = dma.hbm_to_vmem [thread:$0]  %s28, 6144, %s30, [#allocation7], 384, 384, 24
    $region9: #{tpu_custom_call.1} parent=1 // pred_fallthru
      _
    // Predicated region
    $region10: #{tpu_custom_call.1} parent=1 // pred_check
      _
    $region11: #{tpu_custom_call.1} parent=1 // pred_check_branch
      %37 = sbr.rel (0) target = $region13
    $region12: #{tpu_custom_call.1} parent=1 // pred_region
      %39 = dma.done [#allocation4], 256
    $region13: #{tpu_custom_call.1} parent=1 // pred_fallthru
      _
    // Predicated region
    $region14: #{tpu_custom_call.1} parent=1 // pred_check
      _
    $region15: #{tpu_custom_call.1} parent=1 // pred_check_branch
      %41 = sbr.rel (0) target = $region17
    $region16: #{tpu_custom_call.1} parent=1 // pred_region
      %43 = dma.done [#allocation7], 6144
    $region17: #{tpu_custom_call.1} parent=1 // pred_fallthru
      _
    %p44 = scmp.eq.s32.totalorder 0, 0
    // Predicated region
    $region18: #{tpu_custom_call.1} parent=1 // pred_check
      %p45 = pneg %p44
    $region19: #{tpu_custom_call.1} parent=1 // pred_check_branch
      %47 = sbr.rel (%p45) target = $region21
    $region20: #{tpu_custom_call.1} parent=1 // pred_region
      %48 = vst [vmem:[#allocation2] sm:$0xff] 0.0
      %49 = vst [vmem:[#allocation2 + $0x8] sm:$0xff] 0.0
      %50 = vst [vmem:[#allocation2 + $0x10] sm:$0xff] 0.0
      %51 = vst [vmem:[#allocation2 + $0x18] sm:$0xff] 0.0
      %52 = vst [vmem:[#allocation2 + $0x20] sm:$0xff] 0.0
      %53 = vst [vmem:[#allocation2 + $0x28] sm:$0xff] 0.0
    $region21: #{tpu_custom_call.1} parent=1 // pred_fallthru
      _
    %v54 = vld [vmem:[#allocation2] sm:$0xff]
    %v55 = vld [vmem:[#allocation2 + $0x8] sm:$0xff]
    %v56 = vld [vmem:[#allocation2 + $0x10] sm:$0xff]
    %v57 = vld [vmem:[#allocation2 + $0x18] sm:$0xff]
    %v58 = vld [vmem:[#allocation2 + $0x20] sm:$0xff]
    %v59 = vld [vmem:[#allocation2 + $0x28] sm:$0xff]
    %v60 = vld [vmem:[#allocation3] sm:$0xff]
    %v61 = vld [vmem:[#allocation3 + $0x8] sm:$0xff]
    %v62 = vld [vmem:[#allocation6] sm:$0xff]
    %v63 = vld [vmem:[#allocation6 + $0x8] sm:$0xff]
    %v64 = vld [vmem:[#allocation6 + $0x10] sm:$0xff]
    %v65 = vld [vmem:[#allocation6 + $0x18] sm:$0xff]
    %v66 = vld [vmem:[#allocation6 + $0x20] sm:$0xff]
    %v67 = vld [vmem:[#allocation6 + $0x28] sm:$0xff]
    %v68 = vld [vmem:[#allocation6 + $0x30] sm:$0xff]
    %v69 = vld [vmem:[#allocation6 + $0x38] sm:$0xff]
    %v70 = vld [vmem:[#allocation6 + $0x40] sm:$0xff]
    %v71 = vld [vmem:[#allocation6 + $0x48] sm:$0xff]
    %v72 = vld [vmem:[#allocation6 + $0x50] sm:$0xff]
    %v73 = vld [vmem:[#allocation6 + $0x58] sm:$0xff]
    %v74 = vld [vmem:[#allocation6 + $0x60] sm:$0xff]
    %v75 = vld [vmem:[#allocation6 + $0x68] sm:$0xff]
    %v76 = vld [vmem:[#allocation6 + $0x70] sm:$0xff]
    %v77 = vld [vmem:[#allocation6 + $0x78] sm:$0xff]
    %v78 = vld [vmem:[#allocation6 + $0x80] sm:$0xff]
    %v79 = vld [vmem:[#allocation6 + $0x88] sm:$0xff]
    %v80 = vld [vmem:[#allocation6 + $0x90] sm:$0xff]
    %v81 = vld [vmem:[#allocation6 + $0x98] sm:$0xff]
    %v82 = vld [vmem:[#allocation6 + $0xa0] sm:$0xff]
    %v83 = vld [vmem:[#allocation6 + $0xa8] sm:$0xff]
    %v84 = vld [vmem:[#allocation6 + $0xb0] sm:$0xff]
    %v85 = vld [vmem:[#allocation6 + $0xb8] sm:$0xff]
    %v86 = vld [vmem:[#allocation6 + $0xc0] sm:$0xff]
    %v87 = vld [vmem:[#allocation6 + $0xc8] sm:$0xff]
    %v88 = vld [vmem:[#allocation6 + $0xd0] sm:$0xff]
    %v89 = vld [vmem:[#allocation6 + $0xd8] sm:$0xff]
    %v90 = vld [vmem:[#allocation6 + $0xe0] sm:$0xff]
    %v91 = vld [vmem:[#allocation6 + $0xe8] sm:$0xff]
    %v92 = vld [vmem:[#allocation6 + $0xf0] sm:$0xff]
    %v93 = vld [vmem:[#allocation6 + $0xf8] sm:$0xff]
    %v94 = vld [vmem:[#allocation6 + $0x100] sm:$0xff]
    %v95 = vld [vmem:[#allocation6 + $0x108] sm:$0xff]
    %v96 = vld [vmem:[#allocation6 + $0x110] sm:$0xff]
    %v97 = vld [vmem:[#allocation6 + $0x118] sm:$0xff]
    %v98 = vld [vmem:[#allocation6 + $0x120] sm:$0xff]
    %v99 = vld [vmem:[#allocation6 + $0x128] sm:$0xff]
    %v100 = vld [vmem:[#allocation6 + $0x130] sm:$0xff]
    %v101 = vld [vmem:[#allocation6 + $0x138] sm:$0xff]
    %v102 = vld [vmem:[#allocation6 + $0x140] sm:$0xff]
    %v103 = vld [vmem:[#allocation6 + $0x148] sm:$0xff]
    %v104 = vld [vmem:[#allocation6 + $0x150] sm:$0xff]
    %v105 = vld [vmem:[#allocation6 + $0x158] sm:$0xff]
    %v106 = vld [vmem:[#allocation6 + $0x160] sm:$0xff]
    %v107 = vld [vmem:[#allocation6 + $0x168] sm:$0xff]
    %v108 = vld [vmem:[#allocation6 + $0x170] sm:$0xff]
    %v109 = vld [vmem:[#allocation6 + $0x178] sm:$0xff]
    %110 = vmatpush.msra.mxu0 %v107
    %111 = vmatpush.msra.mxu0 %v104
    %112 = vmatpush.msra.mxu0 %v101
    %113 = vmatpush.msra.mxu0 %v98
    %114 = vmatpush.msra.mxu0 %v95
    %115 = vmatpush.msra.mxu0 %v92
    %116 = vmatpush.msra.mxu0 %v89
    %117 = vmatpush.msra.mxu0 %v86
    %118 = vmatpush.msra.mxu0 %v83
    %119 = vmatpush.msra.mxu0 %v80
    %120 = vmatpush.msra.mxu0 %v77
    %121 = vmatpush.msra.mxu0 %v74
    %122 = vmatpush.msra.mxu0 %v71
    %123 = vmatpush.msra.mxu0 %v68
    %124 = vmatpush.msra.mxu0 %v65
    %125 = vmatpush.msra.mxu0 %v62
    %126 = vmatmul.f32.gmra.mxu0 %v60
    %v127 = vpop.f32.mrf.mxu0
    %v128 = vadd.f32 0.0, %v127
    %129 = vmatmul.f32.gmra.mxu0 %v61
    %v130 = vpop.f32.mrf.mxu0
    %v131 = vadd.f32 0.0, %v130
    %132 = vdwg.mxu0
    %133 = vmatpush.msra.mxu0 %v108
    %134 = vmatpush.msra.mxu0 %v105
    %135 = vmatpush.msra.mxu0 %v102
    %136 = vmatpush.msra.mxu0 %v99
    %137 = vmatpush.msra.mxu0 %v96
    %138 = vmatpush.msra.mxu0 %v93
    %139 = vmatpush.msra.mxu0 %v90
    %140 = vmatpush.msra.mxu0 %v87
    %141 = vmatpush.msra.mxu0 %v84
    %142 = vmatpush.msra.mxu0 %v81
    %143 = vmatpush.msra.mxu0 %v78
    %144 = vmatpush.msra.mxu0 %v75
    %145 = vmatpush.msra.mxu0 %v72
    %146 = vmatpush.msra.mxu0 %v69
    %147 = vmatpush.msra.mxu0 %v66
    %148 = vmatpush.msra.mxu0 %v63
    %149 = vmatmul.f32.gmra.mxu0 %v60
    %v150 = vpop.f32.mrf.mxu0
    %v151 = vadd.f32 0.0, %v150
    %152 = vmatmul.f32.gmra.mxu0 %v61
    %v153 = vpop.f32.mrf.mxu0
    %v154 = vadd.f32 0.0, %v153
    %155 = vdwg.mxu0
    %156 = vmatpush.msra.mxu0 %v109
    %157 = vmatpush.msra.mxu0 %v106
    %158 = vmatpush.msra.mxu0 %v103
    %159 = vmatpush.msra.mxu0 %v100
    %160 = vmatpush.msra.mxu0 %v97
    %161 = vmatpush.msra.mxu0 %v94
    %162 = vmatpush.msra.mxu0 %v91
    %163 = vmatpush.msra.mxu0 %v88
    %164 = vmatpush.msra.mxu0 %v85
    %165 = vmatpush.msra.mxu0 %v82
    %166 = vmatpush.msra.mxu0 %v79
    %167 = vmatpush.msra.mxu0 %v76
    %168 = vmatpush.msra.mxu0 %v73
    %169 = vmatpush.msra.mxu0 %v70
    %170 = vmatpush.msra.mxu0 %v67
    %171 = vmatpush.msra.mxu0 %v64
    %172 = vmatmul.f32.gmra.mxu0 %v60
    %v173 = vpop.f32.mrf.mxu0
    %v174 = vadd.f32 0.0, %v173
    %175 = vmatmul.f32.gmra.mxu0 %v61
    %v176 = vpop.f32.mrf.mxu0
    %v177 = vadd.f32 0.0, %v176
    %178 = vdwg.mxu0
    %v179 = vadd.f32 %v54, %v128
    %v180 = vadd.f32 %v55, %v151
    %v181 = vadd.f32 %v56, %v174
    %v182 = vadd.f32 %v57, %v131
    %v183 = vadd.f32 %v58, %v154
    %v184 = vadd.f32 %v59, %v177
    %185 = vst [vmem:[#allocation2] sm:$0xff] %v179
    %186 = vst [vmem:[#allocation2 + $0x8] sm:$0xff] %v180
    %187 = vst [vmem:[#allocation2 + $0x10] sm:$0xff] %v181
    %188 = vst [vmem:[#allocation2 + $0x18] sm:$0xff] %v182
    %189 = vst [vmem:[#allocation2 + $0x20] sm:$0xff] %v183
    %190 = vst [vmem:[#allocation2 + $0x28] sm:$0xff] %v184
    // Predicated region
    $region22: #{tpu_custom_call.1} parent=1 // pred_check
      %p191 = pneg %p44
    $region23: #{tpu_custom_call.1} parent=1 // pred_check_branch
      %193 = sbr.rel (%p191) target = $region25
    $region24: #{tpu_custom_call.1} parent=1 // pred_region
      %v194 = vld [vmem:[#allocation2] sm:$0xff]
      %v195 = vld [vmem:[#allocation2 + $0x8] sm:$0xff]
      %v196 = vld [vmem:[#allocation2 + $0x10] sm:$0xff]
      %v197 = vld [vmem:[#allocation2 + $0x18] sm:$0xff]
      %v198 = vld [vmem:[#allocation2 + $0x20] sm:$0xff]
      %v199 = vld [vmem:[#allocation2 + $0x28] sm:$0xff]
      %200 = vst [vmem:[#allocation8] sm:$0xff] %v194
      %201 = vst [vmem:[#allocation8 + $0x8] sm:$0xff] %v195
      %202 = vst [vmem:[#allocation8 + $0x10] sm:$0xff] %v196
      %203 = vst [vmem:[#allocation8 + $0x18] sm:$0xff] %v197
      %204 = vst [vmem:[#allocation8 + $0x20] sm:$0xff] %v198
      %205 = vst [vmem:[#allocation8 + $0x28] sm:$0xff] %v199
    $region25: #{tpu_custom_call.1} parent=1 // pred_fallthru
      _
    // Predicated region
    $region26: #{tpu_custom_call.1} parent=1 // pred_check
      _
    $region27: #{tpu_custom_call.1} parent=1 // pred_check_branch
      %207 = sbr.rel (0) target = $region29
    $region28: #{tpu_custom_call.1} parent=1 // pred_region
      %209 = vsyncadd [#allocation5], 0
      %s210 = sshll.u32 [#allocation8], 4
      %s211 = int_to_ptr.vmem [resolvable:$true] %s210
      %s212 = sshll.u32 %s2, 4
      %s213 = int_to_ptr.hbm [resolvable:$true] %s212
      %218 = dma.vmem_to_hbm [thread:$0]  %s211, 768, %s213, [#allocation5], 384, 384, 24
    $region29: #{tpu_custom_call.1} parent=1 // pred_fallthru
      _
    // Predicated region
    $region30: #{tpu_custom_call.1} parent=1 // pred_check
      _
    $region31: #{tpu_custom_call.1} parent=1 // pred_check_branch
      %220 = sbr.rel (0) target = $region33
    $region32: #{tpu_custom_call.1} parent=1 // pred_region
      %222 = dma.done [#allocation5], 768
    $region33: #{tpu_custom_call.1} parent=1 // pred_fallthru
      _
    %223 = vsyncpa [#allocation4], 1
    %224 = vsyncpa [#allocation7], 1
    %225 = vsyncpa [#allocation5], 1

</llo_original>
